<compile_context>
chip_gen: v5e
topology: v5e:2x2
jax: 0.10.0
libtpu: 0.0.40
codegen_flags: <defaults>
</compile_context>

<pallas_src>
import jax
import jax.numpy as jnp
from jax.experimental import pallas as pl
from jax.experimental.pallas import tpu as pltpu


def _copy_kernel(x_ref, o_ref):
    # Identity copy of one (tm, lanes) tile, VMEM -> VMEM.
    o_ref[...] = x_ref[...]


def _sublane_multiple(dtype) -> int:
    itemsize = jnp.dtype(dtype).itemsize
    if itemsize >= 4:
        return 8
    if itemsize == 2:
        return 16
    return 32


def _pick_tile(n_elems: int, dtype):
    """Pick (tm, lanes) for a lane-dense streaming copy."""
    # Lane-dense: big multiple of 128 for real workloads, 128 (full vreg lanes,
    # no masked stores) for tiny inputs.
    lanes = 1024 if n_elems >= 1024 else 128
    itemsize = jnp.dtype(dtype).itemsize
    sub = _sublane_multiple(dtype)
    # Target ~2 MiB per block buffer. With default double-buffering that is
    # 2 in + 2 out = ~8 MiB resident: under the 16 MiB v5e scoped-VMEM default
    # and well under v6e (32 MiB) / v7x (32 MiB scoped of 64 MiB physical).
    target_bytes = 2 * 1024 * 1024
    tm = max(sub, (target_bytes // (lanes * itemsize)) // sub * sub)
    # Don't massively over-pad tiny inputs: cap tm at the rows actually needed,
    # rounded up to the dtype's sublane multiple.
    rows_needed = pl.cdiv(n_elems, lanes)
    tm = min(tm, pl.cdiv(rows_needed, sub) * sub)
    return int(tm), int(lanes)


def squeeze_last(x: jax.Array) -> jax.Array:
    """Equivalent of torch.Tensor.squeeze(-1).

    If the last dim is size 1 it is removed; otherwise the tensor is returned
    unchanged (PyTorch semantics). Data movement for the squeezed case goes
    through a tiled, lane-dense Pallas copy kernel.
    """
    if x.ndim == 0 or x.shape[-1] != 1:
        # torch's squeeze(-1) is a no-op when last dim != 1 (or on 0-d input).
        return x

    out_shape = x.shape[:-1]
    n = 1
    for d in out_shape:
        n *= d
    if n == 0:
        # Empty tensor: pure metadata reshape, nothing to copy.
        return x.reshape(out_shape)

    tm, lanes = _pick_tile(n, x.dtype)
    rows = pl.cdiv(n, lanes)
    rows_padded = pl.cdiv(rows, tm) * tm
    n_padded = rows_padded * lanes

    xflat = x.reshape(-1)
    if n_padded != n:
        xflat = jnp.pad(xflat, (0, n_padded - n))
    x2d = xflat.reshape(rows_padded, lanes)

    y2d = pl.pallas_call(
        _copy_kernel,
        out_shape=jax.ShapeDtypeStruct((rows_padded, lanes), x.dtype),
        grid=(rows_padded // tm,),
        in_specs=[pl.BlockSpec((tm, lanes), lambda i: (i, 0))],
        out_specs=pl.BlockSpec((tm, lanes), lambda i: (i, 0)),
        compiler_params=pltpu.CompilerParams(
            dimension_semantics=("parallel",)),  # shards tiles across v7x's 2 TCs
    )(x2d)

    y = y2d.reshape(-1)
    if n_padded != n:
        y = y[:n]
    return y.reshape(out_shape)


if __name__ == "__main__":
    key = jax.random.PRNGKey(0)

    # Small NCHW-style input with a trailing size-1 dim: (B=2, C=4, H=16, W=1)
    x = jax.random.normal(key, (2, 4, 16, 1), dtype=jnp.float32)
    y = squeeze_last(x)
    jax.block_until_ready(y)
    ref = jnp.squeeze(x, axis=-1)
    assert y.shape == (2, 4, 16), y.shape
    assert y.dtype == x.dtype
    assert bool(jnp.allclose(y, ref)), "mismatch vs reference squeeze (f32)"

    # bf16 case (exercises the 16-row sublane-packing path).
    xb = jax.random.normal(jax.random.PRNGKey(1), (2, 4, 16, 1),
                           dtype=jnp.bfloat16)
    yb = squeeze_last(xb)
    jax.block_until_ready(yb)
    assert yb.shape == (2, 4, 16)
    assert yb.dtype == jnp.bfloat16
    assert bool(jnp.all(yb == jnp.squeeze(xb, axis=-1))), "mismatch (bf16)"

    # No-op path: last dim != 1 must be returned unchanged.
    x_noop = jax.random.normal(jax.random.PRNGKey(2), (2, 4, 16, 3),
                               dtype=jnp.float32)
    y_noop = squeeze_last(x_noop)
    assert y_noop.shape == x_noop.shape
    assert bool(jnp.all(y_noop == x_noop)), "no-op path modified the tensor"

    print("KERNEL_OK")
</pallas_src>

<mosaic_0001>
module attributes {stable_mosaic.version = 11 : i64} {
  func.func @_copy_kernel(%arg0: i32, %arg1: memref<8x128xf32, #tpu.memory_space<vmem>>, %arg2: memref<8x128xf32, #tpu.memory_space<vmem>>) attributes {dimension_semantics = [#tpu.dimension_semantics<parallel>], iteration_bounds = array<i64: 1>, scalar_prefetch = 0 : i64, scratch_operands = 0 : i64, tpu.core_type = #tpu.core_type<tc>, window_params = [{transform_indices = @transform_0, window_bounds = array<i64: 8, 128>}, {transform_indices = @transform_1, window_bounds = array<i64: 8, 128>}]} {
    %c0 = arith.constant 0 : index
    %c0_0 = arith.constant 0 : index
    %0 = vector.load %arg1[%c0, %c0_0] : memref<8x128xf32, #tpu.memory_space<vmem>>, vector<8x128xf32>
    %c0_1 = arith.constant 0 : index
    %c0_2 = arith.constant 0 : index
    %1 = vector.load %arg2[%c0_1, %c0_2] : memref<8x128xf32, #tpu.memory_space<vmem>>, vector<8x128xf32>
    tpu.vector_store %arg2[%c0_1, %c0_2], %0 {strides = array<i32>} : memref<8x128xf32, #tpu.memory_space<vmem>>, vector<8x128xf32>,
    return
  }
  func.func @transform_0(%arg0: i32) -> (i32, i32) {
    %c0_i32 = arith.constant 0 : i32
    %c0_i32_0 = arith.constant 0 : i32
    return %arg0, %c0_i32 : i32, i32
  }
  func.func @transform_1(%arg0: i32) -> (i32, i32) {
    %c0_i32 = arith.constant 0 : i32
    %c0_i32_0 = arith.constant 0 : i32
    return %arg0, %c0_i32 : i32, i32
  }
}

</mosaic_0001>

<llo_original>
// kernel: tpu_custom_call.1
$region0: #{tpu_custom_call.1}
  #allocation0 [shape = 'u32[]', space=smem, size = 0x4, offset = 0x4, fixed_abs, tag = 'smem constant byte address 0x4 - core index']
  #allocation1 [shape = 'u32[72,128]{1,0:T(1,128)}', space=vmem, size = 0x9000, scoped, tag = 'internal scratch']
  %s0 = inlined_call_operand.hbm [shape: f32[8,128], index: 0, kind: input, shape index: {}]
  %s1 = inlined_call_operand.hbm [shape: f32[8,128], index: 1, kind: output, shape index: {}]
  %s2 = sld [smem:[#allocation0]]
  $region18: #{tpu_custom_call.1} parent=0
    _
  %s4 = ssub.s32 1, %s2
  %s5 = scalar_select 0, %s4, %s2
  $region1: #{tpu_custom_call.1} parent=0
    #allocation2 [shape = 'u8[4096]{0}', space=vmem, size = 0x1000, scoped, tag = 'input window, operand 0, single buffered']
    #allocation3 [shape = 's32[1]{0}', space=sflag, size = 0x4, scoped, tag = 'scoped memory for tpu_custom_call.1']
    #allocation4 [shape = 's32[1]{0}', space=sflag, size = 0x4, scoped, tag = 'scoped memory for tpu_custom_call.1']
    #allocation5 [shape = 'u8[4096]{0}', space=vmem, size = 0x1000, scoped, tag = 'output window, operand 0, single buffered']
    %6 = vsyncpa [#allocation3], 0
    %7 = vsyncpa [#allocation4], 0
    // Predicated region
    $region2: #{tpu_custom_call.1} parent=1 // pred_check
      _
    $region3: #{tpu_custom_call.1} parent=1 // pred_check_branch
      %9 = sbr.rel (0) target = $region5
    $region4: #{tpu_custom_call.1} parent=1 // pred_region
      %11 = vsyncadd [#allocation3], 0
      %s13 = sshll.u32 %s0, 4
      %s14 = int_to_ptr.hbm [resolvable:$true] %s13
      %s15 = sshll.u32 [#allocation2], 4
      %s16 = int_to_ptr.vmem [resolvable:$true] %s15
      %18 = dma.hbm_to_vmem [thread:$0]  %s14, 128, %s16, [#allocation3]
    $region5: #{tpu_custom_call.1} parent=1 // pred_fallthru
      _
    // Predicated region
    $region6: #{tpu_custom_call.1} parent=1 // pred_check
      _
    $region7: #{tpu_custom_call.1} parent=1 // pred_check_branch
      %20 = sbr.rel (0) target = $region9
    $region8: #{tpu_custom_call.1} parent=1 // pred_region
      %22 = dma.done [#allocation3], 128
    $region9: #{tpu_custom_call.1} parent=1 // pred_fallthru
      _
    %v23 = vld [vmem:[#allocation2] sm:$0xff]
    %24 = vst [vmem:[#allocation5] sm:$0xff] %v23
    // Predicated region
    $region10: #{tpu_custom_call.1} parent=1 // pred_check
      _
    $region11: #{tpu_custom_call.1} parent=1 // pred_check_branch
      %26 = sbr.rel (0) target = $region13
    $region12: #{tpu_custom_call.1} parent=1 // pred_region
      %28 = vsyncadd [#allocation4], 0
      %s30 = sshll.u32 [#allocation5], 4
      %s31 = int_to_ptr.vmem [resolvable:$true] %s30
      %s32 = sshll.u32 %s1, 4
      %s33 = int_to_ptr.hbm [resolvable:$true] %s32
      %35 = dma.vmem_to_hbm [thread:$0]  %s31, 128, %s33, [#allocation4]
    $region13: #{tpu_custom_call.1} parent=1 // pred_fallthru
      _
    // Predicated region
    $region14: #{tpu_custom_call.1} parent=1 // pred_check
      _
    $region15: #{tpu_custom_call.1} parent=1 // pred_check_branch
      %37 = sbr.rel (0) target = $region17
    $region16: #{tpu_custom_call.1} parent=1 // pred_region
      %39 = dma.done [#allocation4], 128
    $region17: #{tpu_custom_call.1} parent=1 // pred_fallthru
      _
    %40 = vsyncpa [#allocation3], 1
    %41 = vsyncpa [#allocation4], 1

</llo_original>
